<compile_context>
chip_gen: v7x
topology: tpu7x:2x2x1
jax: 0.10.0
libtpu: 0.0.40
codegen_flags: <defaults>
</compile_context>

<pallas_src>
import functools
import math

import jax
import jax.numpy as jnp
from jax.experimental import pallas as pl
from jax.experimental.pallas import tpu as pltpu

_LANES = 128
_TM_MAX = 1024
_MIB = 1024 * 1024


def _round_up(x, n):
    return (x + n - 1) // n * n


def _sublane_multiple(dtype):
    # f32 -> 8, bf16 -> 16, int8/fp8 -> 32 (sub-32-bit dtypes pack on sublanes).
    itemsize = jnp.dtype(dtype).itemsize
    return 8 * max(1, 4 // itemsize)


@functools.lru_cache(maxsize=1)
def _vmem_info():
    """(physical_vmem_bytes, tile_budget_bytes) — generation aware."""
    phys = 64 * _MIB  # conservative default (v7x-sized) if query fails
    try:
        info = pltpu.get_tpu_info()
        for name in ("vmem_capacity_bytes", "vmem_bytes", "vmem_size_bytes"):
            v = getattr(info, name, None)
            if v:
                phys = int(v)
                break
    except Exception:
        pass
    # ~70% of physical for the pipelined working set:
    # ~90 MiB on v5e/v6e (128 MiB), ~45 MiB on v7x (64 MiB).
    return phys, int(phys * 0.7)


def _compiler_params(needed_bytes, *, semantics):
    phys, _ = _vmem_info()
    limit = int(min(max(needed_bytes + 4 * _MIB, 32 * _MIB), phys - 4 * _MIB))
    return pltpu.CompilerParams(dimension_semantics=semantics,
                                vmem_limit_bytes=limit)


def _choose_tm(m, per_row_bytes, resident_bytes, budget):
    """Largest multiple-of-8 row tile whose working set fits the budget."""
    avail = max(budget - resident_bytes, 8 * per_row_bytes)
    tm = max(8, min(_TM_MAX, (avail // per_row_bytes) // 8 * 8))
    tm = min(tm, _round_up(m, 8))
    # Ensure >= 2 grid steps so both v7x TensorCores get a "parallel" step.
    if m > 8 and pl.cdiv(m, tm) < 2:
        tm = _round_up(pl.cdiv(m, 2), 8)
    return int(tm)


# ----------------------------------------------------------------------------
# Kernels
# ----------------------------------------------------------------------------
def _fused_low_rank_kernel(x_ref, aw_ref, bw_ref, bb_ref, o_ref):
    # Two chained MXU matmuls, f32 accumulation; a_b already folded into bb.
    h = jnp.dot(x_ref[...], aw_ref[...],
                preferred_element_type=jnp.float32)            # [TM, rank_p]
    y = jnp.dot(h.astype(bw_ref.dtype), bw_ref[...],
                preferred_element_type=jnp.float32)            # [TM, out_dim]
    o_ref[...] = (y + bb_ref[...]).astype(o_ref.dtype)


def _resident_linear_kernel(x_ref, w_ref, b_ref, o_ref):
    # Single MXU matmul with fully VMEM-resident weights.
    y = jnp.dot(x_ref[...], w_ref[...], preferred_element_type=jnp.float32)
    o_ref[...] = (y + b_ref[...]).astype(o_ref.dtype)


def _tiled_linear_kernel(x_ref, w_ref, b_ref, o_ref, acc_ref):
    # K/N-tiled fallback for weights that do not fit VMEM.
    k = pl.program_id(2)

    @pl.when(k == 0)
    def _init():
        acc_ref[...] = jnp.zeros_like(acc_ref)

    acc_ref[...] += jnp.dot(x_ref[...], w_ref[...],
                            preferred_element_type=jnp.float32)

    @pl.when(k == pl.num_programs(2) - 1)
    def _fini():
        o_ref[...] = (acc_ref[...] + b_ref[...]).astype(o_ref.dtype)


# ----------------------------------------------------------------------------
# One-time parameter preparation
# ----------------------------------------------------------------------------
def prepare_low_rank_params(a_w, a_b, b_w, b_b, *, fold_if_beneficial=True,
                            param_dtype=None):
    """a_w: [rank, in_dim], a_b: [rank], b_w: [out_dim, rank], b_b: [out_dim].

    param_dtype: optionally cast weights (e.g. jnp.bfloat16 on v6e/v7x for
    compute-bound shapes).  Biases stay f32; accumulation is always f32.
    """
    rank, in_dim = a_w.shape
    out_dim = b_w.shape[0]
    w_dtype = jnp.dtype(param_dtype) if param_dtype is not None else a_w.dtype
    sub = _sublane_multiple(w_dtype)
    k_pad = _round_up(in_dim, sub)       # minimal sublane pad; NOT 128 lanes
    rank_p = _round_up(rank, _LANES)     # lane-dense intermediate (VMEM only)

    # A^T: K on sublanes, rank on lanes.  B^T: rank on sublanes, out on lanes
    # kept at native width so the kernel stores out_dim lanes directly.
    aw_t = jnp.zeros((k_pad, rank_p), w_dtype).at[:in_dim, :rank].set(
        a_w.T.astype(w_dtype))
    bw_t = jnp.zeros((rank_p, out_dim), w_dtype).at[:rank, :].set(
        b_w.T.astype(w_dtype))
    # Fold a_b into the output bias (exact: the block is purely linear).
    bb = (a_b.astype(jnp.float32)[None, :] @ b_w.T.astype(jnp.float32)
          + b_b.astype(jnp.float32)[None, :])                  # [1, out_dim]

    # Fold A and B into one matmul when the MXU-granular low-rank split
    # would not actually save work (true for the tiny demo shapes).
    in_mxu = _round_up(in_dim, _LANES)
    out_mxu = _round_up(out_dim, _LANES)
    fold = fold_if_beneficial and rank_p * (in_mxu + out_mxu) >= in_mxu * out_mxu
    if fold:
        w = jnp.dot(aw_t.astype(jnp.float32), bw_t.astype(jnp.float32),
                    preferred_element_type=jnp.float32).astype(w_dtype)
        return ("folded", w, bb, out_dim)
    return ("low_rank", aw_t, bw_t, bb, out_dim)


# ----------------------------------------------------------------------------
# Forward wrappers
# ----------------------------------------------------------------------------
def _flatten_x(x, k_pad):
    in_dim = x.shape[-1]
    lead = x.shape[:-1]
    m = math.prod(lead) if lead else 1
    x2 = x.reshape(m, in_dim)
    if k_pad != in_dim:  # only when in_dim isn't a multiple of the sublane size
        x2 = jnp.pad(x2, ((0, 0), (0, k_pad - in_dim)))
    return x2, lead, m


@functools.partial(jax.jit, static_argnames=("out_dim",))
def _fused_low_rank(x, aw_t, bw_t, bb, *, out_dim):
    k_pad, rank_p = aw_t.shape
    itemsize = jnp.dtype(x.dtype).itemsize
    w_item = jnp.dtype(aw_t.dtype).itemsize
    x2, lead, m = _flatten_x(x, k_pad)
    _, budget = _vmem_info()

    # Resident weights/bias counted 2x (Pallas double-buffers every input).
    resident = 2 * ((k_pad * rank_p + rank_p * out_dim) * w_item + out_dim * 4)
    per_row = 2 * (k_pad + out_dim) * itemsize + (rank_p + out_dim) * 4
    tm = _choose_tm(m, per_row, resident, budget)
    grid_m = pl.cdiv(m, tm)
    needed = resident + tm * per_row

    out2 = pl.pallas_call(
        _fused_low_rank_kernel,
        out_shape=jax.ShapeDtypeStruct((m, out_dim), x.dtype),
        grid_spec=pl.GridSpec(
            grid=(grid_m,),
            in_specs=[
                pl.BlockSpec((tm, k_pad), lambda i: (i, 0)),        # x tile
                pl.BlockSpec((k_pad, rank_p), lambda i: (0, 0)),    # A^T resident
                pl.BlockSpec((rank_p, out_dim), lambda i: (0, 0)),  # B^T resident
                pl.BlockSpec((1, out_dim), lambda i: (0, 0)),       # bias resident
            ],
            out_specs=pl.BlockSpec((tm, out_dim), lambda i: (i, 0)),
        ),
        compiler_params=_compiler_params(needed, semantics=("parallel",)),
        cost_estimate=pl.CostEstimate(
            flops=2 * m * rank_p * (k_pad + out_dim), transcendentals=0,
            bytes_accessed=m * (k_pad + out_dim) * itemsize + resident // 2),
    )(x2, aw_t, bw_t, bb)
    return out2.reshape(*lead, out_dim)


def _tiled_linear(x2, w, b, *, budget):
    """y = x2 @ w + b with M/N/K tiling (weights too large for VMEM)."""
    m, k = x2.shape
    _, n = w.shape
    itemsize = jnp.dtype(x2.dtype).itemsize
    w_item = jnp.dtype(w.dtype).itemsize

    tn = n if n <= 512 else 512                       # full extent or 128-mult
    tk = k
    if k > 2048:                                      # K tile must divide K
        for cand in (2048, 1024, 512, 256, 128):
            if k % cand == 0:
                tk = cand
                break

    fixed = 2 * tk * tn * w_item + 2 * tn * 4
    per_row = 2 * (tk + tn) * itemsize + tn * 4       # x/out tiles + f32 acc
    tm = max(8, min(_TM_MAX, ((budget - fixed) // per_row) // 8 * 8))
    tm = min(tm, _round_up(m, 8))
    if m > 8 and pl.cdiv(m, tm) < 2:
        tm = _round_up(pl.cdiv(m, 2), 8)
    needed = fixed + tm * per_row
    grid = (pl.cdiv(m, tm), pl.cdiv(n, tn), k // tk)

    return pl.pallas_call(
        _tiled_linear_kernel,
        out_shape=jax.ShapeDtypeStruct((m, n), x2.dtype),
        grid_spec=pl.GridSpec(
            grid=grid,
            in_specs=[
                pl.BlockSpec((tm, tk), lambda i, j, kk: (i, kk)),
                pl.BlockSpec((tk, tn), lambda i, j, kk: (kk, j)),
                pl.BlockSpec((1, tn), lambda i, j, kk: (0, j)),
            ],
            out_specs=pl.BlockSpec((tm, tn), lambda i, j, kk: (i, j)),
            scratch_shapes=[pltpu.VMEM((tm, tn), jnp.float32)],
        ),
        compiler_params=_compiler_params(
            needed, semantics=("parallel", "parallel", "arbitrary")),
        cost_estimate=pl.CostEstimate(
            flops=2 * m * k * n, transcendentals=0,
            bytes_accessed=(grid[1] * m * k * itemsize + k * n * w_item
                            + m * n * itemsize)),
    )(x2, w, b)


@functools.partial(jax.jit, static_argnames=("out_dim", "force_tiled"))
def _linear(x, w, b, *, out_dim, force_tiled=False):
    """Single linear y = x @ w + b; picks resident vs tiled path by VMEM fit."""
    k_pad, n = w.shape
    itemsize = jnp.dtype(x.dtype).itemsize
    w_item = jnp.dtype(w.dtype).itemsize
    x2, lead, m = _flatten_x(x, k_pad)
    _, budget = _vmem_info()

    resident = 2 * (k_pad * n * w_item + n * 4)
    per_row = 2 * (k_pad + n) * itemsize + n * 4
    if force_tiled or resident + 8 * per_row > budget:
        out2 = _tiled_linear(x2, w, b, budget=budget)
    else:
        tm = _choose_tm(m, per_row, resident, budget)
        grid_m = pl.cdiv(m, tm)
        needed = resident + tm * per_row
        out2 = pl.pallas_call(
            _resident_linear_kernel,
            out_shape=jax.ShapeDtypeStruct((m, n), x.dtype),
            grid_spec=pl.GridSpec(
                grid=(grid_m,),
                in_specs=[
                    pl.BlockSpec((tm, k_pad), lambda i: (i, 0)),   # x tile
                    pl.BlockSpec((k_pad, n), lambda i: (0, 0)),    # W resident
                    pl.BlockSpec((1, n), lambda i: (0, 0)),        # bias resident
                ],
                out_specs=pl.BlockSpec((tm, n), lambda i: (i, 0)),
            ),
            compiler_params=_compiler_params(needed, semantics=("parallel",)),
            cost_estimate=pl.CostEstimate(
                flops=2 * m * k_pad * n, transcendentals=0,
                bytes_accessed=m * (k_pad + n) * itemsize + resident // 2),
        )(x2, w, b)
    return out2.reshape(*lead, out_dim)


def low_rank_block(x, params):
    """Forward of LowRankBlock: B(A(x)). `params` from prepare_low_rank_params."""
    if params[0] == "folded":
        _, w, bb, out_dim = params
        return _linear(x, w, bb, out_dim=out_dim)
    _, aw_t, bw_t, bb, out_dim = params
    k_pad, rank_p = aw_t.shape
    w_item = jnp.dtype(aw_t.dtype).itemsize
    _, budget = _vmem_info()
    resident = 2 * ((k_pad * rank_p + rank_p * out_dim) * w_item + out_dim * 4)
    if resident <= budget // 2:
        return _fused_low_rank(x, aw_t, bw_t, bb, out_dim=out_dim)
    # Weights too large to keep VMEM-resident: two tiled linears through HBM.
    zero_bias = jnp.zeros((1, rank_p), jnp.float32)
    h = _linear(x, aw_t, zero_bias, out_dim=rank_p)
    return _linear(h, bw_t, bb, out_dim=out_dim)


if __name__ == "__main__":
    # Small shapes consistent with LowRankBlock(in_dim=32, out_dim=32, rank=8).
    in_dim, out_dim, rank = 32, 32, 8
    batch, seq = 2, 8

    key = jax.random.PRNGKey(0)
    kx, kaw, kab, kbw, kbb = jax.random.split(key, 5)

    x = jax.random.normal(kx, (batch, seq, in_dim), dtype=jnp.float32)
    # PyTorch nn.Linear weight layouts.
    a_w = jax.random.normal(kaw, (rank, in_dim), dtype=jnp.float32) * 0.1
    a_b = jax.random.normal(kab, (rank,), dtype=jnp.float32) * 0.1
    b_w = jax.random.normal(kbw, (out_dim, rank), dtype=jnp.float32) * 0.1
    b_b = jax.random.normal(kbb, (out_dim,), dtype=jnp.float32) * 0.1

    # Reference (same math as the torch forward).
    ref = (x @ a_w.T + a_b) @ b_w.T + b_b

    # Auto path: for these tiny dims the prep step folds A and B (1 matmul).
    params_auto = prepare_low_rank_params(a_w, a_b, b_w, b_b)
    out_auto = low_rank_block(x, params_auto)
    jax.block_until_ready(out_auto)

    # Explicit two-matmul fused path (realistic large-feature / small-rank use).
    params_lr = prepare_low_rank_params(a_w, a_b, b_w, b_b,
                                        fold_if_beneficial=False)
    out_lr = low_rank_block(x, params_lr)
    jax.block_until_ready(out_lr)

    # Exercise the K/N-tiled fallback kernel (used when weights exceed VMEM).
    out_tiled = _linear(x, params_auto[1], params_auto[2], out_dim=out_dim,
                        force_tiled=True)
    jax.block_until_ready(out_tiled)

    assert out_auto.shape == (batch, seq, out_dim)
    assert out_lr.shape == (batch, seq, out_dim)
    assert out_tiled.shape == (batch, seq, out_dim)
    assert jnp.allclose(out_auto, ref, atol=1e-4, rtol=1e-4)
    assert jnp.allclose(out_lr, ref, atol=1e-4, rtol=1e-4)
    assert jnp.allclose(out_tiled, ref, atol=1e-4, rtol=1e-4)

    print("KERNEL_OK")
</pallas_src>

<mosaic_0001>
module attributes {stable_mosaic.version = 11 : i64} {
  func.func @_resident_linear_kernel(%arg0: i32, %arg1: memref<8x32xf32, #tpu.memory_space<vmem>>, %arg2: memref<32x32xf32, #tpu.memory_space<vmem>>, %arg3: memref<1x32xf32, #tpu.memory_space<vmem>>, %arg4: memref<8x32xf32, #tpu.memory_space<vmem>>) attributes {dimension_semantics = [#tpu.dimension_semantics<parallel>], iteration_bounds = array<i64: 2>, scalar_prefetch = 0 : i64, scratch_operands = 0 : i64, tpu.core_type = #tpu.core_type<tc>, window_params = [{transform_indices = @transform_0, window_bounds = array<i64: 8, 32>}, {pipeline_mode = #tpu.pipeline_mode<synchronous>, transform_indices = @transform_1, window_bounds = array<i64: 32, 32>}, {pipeline_mode = #tpu.pipeline_mode<synchronous>, transform_indices = @transform_2, window_bounds = array<i64: 1, 32>}, {transform_indices = @transform_3, window_bounds = array<i64: 8, 32>}]} {
    %c0 = arith.constant 0 : index
    %c0_0 = arith.constant 0 : index
    %0 = vector.load %arg1[%c0, %c0_0] : memref<8x32xf32, #tpu.memory_space<vmem>>, vector<8x32xf32>
    %c0_1 = arith.constant 0 : index
    %c0_2 = arith.constant 0 : index
    %1 = vector.load %arg2[%c0_1, %c0_2] : memref<32x32xf32, #tpu.memory_space<vmem>>, vector<32x32xf32>
    %cst = arith.constant dense<0.000000e+00> : vector<8x32xf32>
    %2 = tpu.matmul %0, %1, %cst {dimension_numbers = #tpu.dot_dimension_numbers<[1], [0], [0], [1], [0, 0, 1, 1], [], []>} : vector<8x32xf32>, vector<32x32xf32>, vector<8x32xf32> -> vector<8x32xf32>
    %c0_3 = arith.constant 0 : index
    %c0_4 = arith.constant 0 : index
    %3 = vector.load %arg3[%c0_3, %c0_4] : memref<1x32xf32, #tpu.memory_space<vmem>>, vector<1x32xf32>
    %4 = vector.broadcast %3 : vector<1x32xf32> to vector<8x32xf32>
    %5 = arith.addf %2, %4 : vector<8x32xf32>
    %c0_5 = arith.constant 0 : index
    %c0_6 = arith.constant 0 : index
    %6 = vector.load %arg4[%c0_5, %c0_6] : memref<8x32xf32, #tpu.memory_space<vmem>>, vector<8x32xf32>
    tpu.vector_store %arg4[%c0_5, %c0_6], %5 {strides = array<i32>} : memref<8x32xf32, #tpu.memory_space<vmem>>, vector<8x32xf32>,
    return
  }
  func.func @transform_0(%arg0: i32) -> (i32, i32) {
    %c0_i32 = arith.constant 0 : i32
    %c0_i32_0 = arith.constant 0 : i32
    return %arg0, %c0_i32 : i32, i32
  }
  func.func @transform_1(%arg0: i32) -> (i32, i32) {
    %c0_i32 = arith.constant 0 : i32
    %c0_i32_0 = arith.constant 0 : i32
    %c0_i32_1 = arith.constant 0 : i32
    return %c0_i32, %c0_i32_0 : i32, i32
  }
  func.func @transform_2(%arg0: i32) -> (i32, i32) {
    %c0_i32 = arith.constant 0 : i32
    %c0_i32_0 = arith.constant 0 : i32
    %c0_i32_1 = arith.constant 0 : i32
    return %c0_i32, %c0_i32_0 : i32, i32
  }
  func.func @transform_3(%arg0: i32) -> (i32, i32) {
    %c0_i32 = arith.constant 0 : i32
    %c0_i32_0 = arith.constant 0 : i32
    return %arg0, %c0_i32 : i32, i32
  }
}

</mosaic_0001>

<llo_original>
// kernel: _linear.1
$region0: #{_linear.1}
  #allocation0 [shape = 'u32[]', space=smem, size = 0x4, offset = 0x4, fixed_abs, tag = 'smem constant byte address 0x4 - core index']
  #allocation1 [shape = 'u32[144,128]{1,0:T(1,128)}', space=vmem, size = 0x12000, scoped, tag = 'internal scratch']
  %s0 = inlined_call_operand.hbm [shape: f32[16,32], index: 0, kind: input, shape index: {}]
  %s1 = inlined_call_operand.hbm [shape: f32[32,32], index: 1, kind: input, shape index: {}]
  %s2 = inlined_call_operand.vmem [shape: f32[1,32], index: 2, kind: input, shape index: {}]
  %s3 = inlined_call_operand.hbm [shape: f32[16,32], index: 3, kind: output, shape index: {}]
  %s4 = sld [smem:[#allocation0]]
  $region53: #{_linear.1} parent=0
    _
  %s6 = ssub.s32 1, %s4
  %s7 = scalar_select 0, %s6, %s4
  $region1: #{_linear.1} parent=0
    #allocation2 [shape = 'u8[8192]{0}', space=vmem, size = 0x2000, scoped, tag = 'input window, operand 0']
    #allocation3 [shape = 's32[2]{0}', space=sflag, size = 0x8, scoped, tag = 'scoped memory for _linear.1']
    #allocation4 [shape = 's32[2]{0}', space=sflag, size = 0x8, scoped, tag = 'scoped memory for _linear.1']
    #allocation5 [shape = 'u8[16384]{0}', space=vmem, size = 0x4000, scoped, tag = 'input window, operand 1, single buffered']
    #allocation6 [shape = 's32[1]{0}', space=sflag, size = 0x4, scoped, tag = 'scoped memory for _linear.1']
    #allocation7 [shape = 'u8[8192]{0}', space=vmem, size = 0x2000, scoped, tag = 'output window, operand 0']
    %8 = vsyncpa [#allocation3], 0
    %s9 = scalar_lea.sflag [#allocation3], 1
    %10 = vsyncpa %s9, 0
    %11 = vsyncpa [#allocation6], 0
    %12 = vsyncpa [#allocation4], 0
    %s13 = scalar_lea.sflag [#allocation4], 1
    %14 = vsyncpa %s13, 0
    loop: start=0, step=1, limit=4
    $region2: #{_linear.1} parent=1 // loop_pre_header
      _
    $region3: #{_linear.1} parent=1 // loop_header
      %s16 = sphi 0, %s20
      %p17 = scmp.ge.s32.totalorder %s16, 4
      %s26 = sphi 0, %s28
      %s29 = sphi 0, %s26
      %s30 = sphi 0, %s29
      %s46 = sphi 0, %s30
      %s50 = sphi 0, %s50
      %s52 = sphi 0, %s50
      %s53 = sphi 0, %s52
      %s67 = sphi 0, %s53
      %s71 = sphi 0, %s71
      %s73 = sphi 0, %s71
      %s74 = sphi 0, %s73
      %s88 = sphi 0, %s74
      %s94 = sphi 0, %s96
      %s97 = sphi 0, %s94
      %s98 = sphi 0, %s97
      %s114 = sphi 0, %s98
    $region4: #{_linear.1} parent=1 // loop_header_branch
      %19 = sbr.rel (%p17) target = $region8
    $region5: #{_linear.1} parent=1 // loop_body
      %s21 = ssub.s32 %s16, 1
      %s22 = ssub.s32 %s16, 2
      %s23 = sadd.s32 %s16, 1
      %s24 = ssub.s32 %s16, %s23
      %p25 = scmp.eq.s32.totalorder %s24, 0
      %s27 = sadd.s32 %s26, 1
      %s28 = scalar_select %p25, %s26, %s27
      %p31 = pneg %p25
      %p32 = scmp.eq.s32.totalorder %s16, 1
      %p33 = por %p31, %p32
      %p34 = scmp.ne.s32.totalorder %s26, %s29
      %p35 = scmp.eq.s32.totalorder %s16, 0
      %p36 = por %p34, %p35
      %p37 = scmp.ne.s32.totalorder %s26, %s29
      %p38 = scmp.eq.s32.totalorder %s21, 1
      %p39 = por %p37, %p38
      %p40 = scmp.ne.s32.totalorder %s29, %s30
      %p41 = scmp.eq.s32.totalorder %s21, 0
      %p42 = por %p40, %p41
      %p43 = scmp.ne.s32.totalorder %s29, %s30
      %p44 = scmp.eq.s32.totalorder %s22, 1
      %p45 = por %p43, %p44
      %p47 = scmp.ne.s32.totalorder %s30, %s46
      %p48 = scmp.eq.s32.totalorder %s22, 0
      %p49 = por %p47, %p48
      %s51 = sadd.s32 %s50, 1
      %p54 = scmp.eq.s32.totalorder %s16, 1
      %p55 = scmp.ne.s32.totalorder %s50, %s52
      %p56 = scmp.eq.s32.totalorder %s16, 0
      %p57 = por %p55, %p56
      %p58 = scmp.ne.s32.totalorder %s50, %s52
      %p59 = scmp.eq.s32.totalorder %s21, 1
      %p60 = por %p58, %p59
      %p61 = scmp.ne.s32.totalorder %s52, %s53
      %p62 = scmp.eq.s32.totalorder %s21, 0
      %p63 = por %p61, %p62
      %p64 = scmp.ne.s32.totalorder %s52, %s53
      %p65 = scmp.eq.s32.totalorder %s22, 1
      %p66 = por %p64, %p65
      %p68 = scmp.ne.s32.totalorder %s53, %s67
      %p69 = scmp.eq.s32.totalorder %s22, 0
      %p70 = por %p68, %p69
      %s72 = sadd.s32 %s71, 1
      %p75 = scmp.eq.s32.totalorder %s16, 1
      %p76 = scmp.ne.s32.totalorder %s71, %s73
      %p77 = scmp.eq.s32.totalorder %s16, 0
      %p78 = por %p76, %p77
      %p79 = scmp.ne.s32.totalorder %s71, %s73
      %p80 = scmp.eq.s32.totalorder %s21, 1
      %p81 = por %p79, %p80
      %p82 = scmp.ne.s32.totalorder %s73, %s74
      %p83 = scmp.eq.s32.totalorder %s21, 0
      %p84 = por %p82, %p83
      %p85 = scmp.ne.s32.totalorder %s73, %s74
      %p86 = scmp.eq.s32.totalorder %s22, 1
      %p87 = por %p85, %p86
      %p89 = scmp.ne.s32.totalorder %s74, %s88
      %p90 = scmp.eq.s32.totalorder %s22, 0
      %p91 = por %p89, %p90
      %s92 = ssub.s32 %s16, %s23
      %p93 = scmp.eq.s32.totalorder %s92, 0
      %s95 = sadd.s32 %s94, 1
      %s96 = scalar_select %p93, %s94, %s95
      %p99 = pneg %p93
      %p100 = scmp.eq.s32.totalorder %s16, 1
      %p101 = por %p99, %p100
      %p102 = scmp.ne.s32.totalorder %s94, %s97
      %p103 = scmp.eq.s32.totalorder %s16, 0
      %p104 = por %p102, %p103
      %p105 = scmp.ne.s32.totalorder %s94, %s97
      %p106 = scmp.eq.s32.totalorder %s21, 1
      %p107 = por %p105, %p106
      %p108 = scmp.ne.s32.totalorder %s97, %s98
      %p109 = scmp.eq.s32.totalorder %s21, 0
      %p110 = por %p108, %p109
      %p111 = scmp.ne.s32.totalorder %s97, %s98
      %p112 = scmp.eq.s32.totalorder %s22, 1
      %p113 = por %p111, %p112
      %p115 = scmp.ne.s32.totalorder %s98, %s114
      %p116 = scmp.eq.s32.totalorder %s22, 0
      %p117 = por %p115, %p116
      %p118 = scmp.le.s32.totalorder 1, %s16
      %p119 = scmp.lt.s32.totalorder %s16, 3
      %p120 = pnand %p118, %p119
      %p121 = pneg %p120
      // Predicated region
      $region9: #{_linear.1} parent=5 // pred_check
        _
      $region10: #{_linear.1} parent=5 // pred_check_branch
        %123 = sbr.rel (%p120) target = $region12
      $region11: #{_linear.1} parent=5 // pred_region
        %s124 = ssub.s32 %s16, 1
        // Predicated region
        $region13: #{_linear.1} parent=11 // pred_check
          %p125 = pneg %p63
        $region14: #{_linear.1} parent=11 // pred_check_branch
          %127 = sbr.rel (%p125) target = $region16
        $region15: #{_linear.1} parent=11 // pred_region
          %s129 = ssub.s32 512, 512
          %130 = vsyncadd [#allocation6], %s129
          %s131 = sshll.u32 [#allocation5], 4
          %s132 = int_to_ptr.vmem [resolvable:$true] %s131
          %137 = dma.hbm_to_vmem [thread:$0]  %s1, 512, %s132, [#allocation6], 128, 128, 8
        $region16: #{_linear.1} parent=11 // pred_fallthru
          _
        // Predicated region
        $region17: #{_linear.1} parent=11 // pred_check
          %p138 = pneg %p84
        $region18: #{_linear.1} parent=11 // pred_check_branch
          %140 = sbr.rel (%p138) target = $region20
        $region19: #{_linear.1} parent=11 // pred_region
          _
        $region20: #{_linear.1} parent=11 // pred_fallthru
          _
      $region12: #{_linear.1} parent=5 // pred_fallthru
        _
      %p141 = scmp.lt.s32.totalorder %s16, 2
      // Predicated region
      $region21: #{_linear.1} parent=5 // pred_check
        %p142 = pneg %p141
      $region22: #{_linear.1} parent=5 // pred_check_branch
        %144 = sbr.rel (%p142) target = $region24
      $region23: #{_linear.1} parent=5 // pred_region
        // Predicated region
        $region25: #{_linear.1} parent=23 // pred_check
          %p145 = pneg %p36
        $region26: #{_linear.1} parent=23 // pred_check_branch
          %147 = sbr.rel (%p145) target = $region28
        $region27: #{_linear.1} parent=23 // pred_region
          %s148 = sand.u32 %s26, 1
          %s149 = scalar_lea.sflag [#allocation3], %s148
          %s150 = sand.u32 %s26, 1
          %s151 = smul.addr %s150, 8
          %s152 = scalar_lea.vmem [#allocation2], %s151
          %s154 = ssub.s32 128, 128
          %155 = vsyncadd %s149, %s154
          %s156 = smul.addr %s16, 128
          %s157 = scalar_lea.hbm %s0, %s156
          %s159 = sshll.u32 %s152, 4
          %s160 = int_to_ptr.vmem [resolvable:$true] %s159
          %162 = dma.hbm_to_vmem [thread:$0]  %s157, 128, %s160, %s149
        $region28: #{_linear.1} parent=23 // pred_fallthru
          _
      $region24: #{_linear.1} parent=5 // pred_fallthru
        _
      %p163 = scmp.le.s32.totalorder 1, %s16
      %p164 = scmp.lt.s32.totalorder %s16, 3
      %p165 = pnand %p163, %p164
      %p166 = pneg %p165
      // Predicated region
      $region29: #{_linear.1} parent=5 // pred_check
        _
      $region30: #{_linear.1} parent=5 // pred_check_branch
        %168 = sbr.rel (%p165) target = $region32
      $region31: #{_linear.1} parent=5 // pred_region
        %s169 = ssub.s32 %s16, 1
        %s170 = sand.u32 %s29, 1
        %s171 = scalar_lea.sflag [#allocation3], %s170
        %s172 = sand.u32 %s29, 1
        %s173 = smul.addr %s172, 8
        %s174 = scalar_lea.vmem [#allocation2], %s173
        // Predicated region
        $region33: #{_linear.1} parent=31 // pred_check
          %p175 = pneg %p42
        $region34: #{_linear.1} parent=31 // pred_check_branch
          %177 = sbr.rel (%p175) target = $region36
        $region35: #{_linear.1} parent=31 // pred_region
          %178 = dma.done %s171, 128
        $region36: #{_linear.1} parent=31 // pred_fallthru
          _
        // Predicated region
        $region37: #{_linear.1} parent=31 // pred_check
          %p179 = pneg %p63
        $region38: #{_linear.1} parent=31 // pred_check_branch
          %181 = sbr.rel (%p179) target = $region40
        $region39: #{_linear.1} parent=31 // pred_region
          %182 = dma.done [#allocation6], 512
        $region40: #{_linear.1} parent=31 // pred_fallthru
          _
        %s183 = sand.u32 %s29, 1
        %s184 = scalar_lea.sflag [#allocation3], %s183
        %s185 = sand.u32 %s29, 1
        %s186 = smul.addr %s185, 8
        %s187 = scalar_lea.vmem [#allocation2], %s186
        %p188 = pneg %p42
        %p189 = pneg %p39
        %p190 = pneg %p63
        %p191 = pneg %p60
        %p192 = pneg %p84
        %p193 = pneg %p81
        %p194 = pneg %p110
        %p195 = pneg %p107
        %s196 = sand.u32 %s97, 1
        %s197 = scalar_lea.sflag [#allocation4], %s196
        %s198 = sand.u32 %s97, 1
        %s199 = smul.addr %s198, 8
        %s200 = scalar_lea.vmem [#allocation7], %s199
        %v201 = vld [vmem:[%s174] sm:$0xff]
        %v202 = vld [vmem:[#allocation5] sm:$0xff]
        %v203 = vld [vmem:[#allocation5 + $0x8] sm:$0xff]
        %v204 = vld [vmem:[#allocation5 + $0x10] sm:$0xff]
        %v205 = vld [vmem:[#allocation5 + $0x18] sm:$0xff]
        %v206 = vld [vmem:[%s2] sm:$0x1]
        %v208 = vlaneseq
        %v209 = vshrl.u32 %v208, 7
        %v210 = vsub.s32 0, %v209
        %v211 = vrot.slane %v206, %v210
        %vm213 = vcmask 261120
        %v215 = vsel %vm213, %v201, 0
        %217 = vmatprep.subr.mxu0 0.0
        %218 = vmatpush1.msra.mxu0 %v202
        %219 = vmatprep.subr.mxu0 0.0
        %220 = vmatpush1.msra.mxu0 %v203
        %221 = vmatprep.subr.mxu0 0.0
        %222 = vmatpush1.msra.mxu0 %v204
        %223 = vmatprep.subr.mxu0 0.0
        %224 = vmatpush1.msra.mxu0 %v205
        %225 = vmatprep.subr.mxu0 0.0
        %226 = vmatpush1.msra.mxu0 0.0
        %227 = vmatprep.subr.mxu0 0.0
        %228 = vmatpush1.msra.mxu0 0.0
        %229 = vmatprep.subr.mxu0 0.0
        %230 = vmatpush1.msra.mxu0 0.0
        %231 = vmatprep.subr.mxu0 0.0
        %232 = vmatpush1.msra.mxu0 0.0
        %233 = vmatprep.subr.mxu0 0.0
        %234 = vmatpush1.msra.mxu0 0.0
        %235 = vmatprep.subr.mxu0 0.0
        %236 = vmatpush1.msra.mxu0 0.0
        %237 = vmatprep.subr.mxu0 0.0
        %238 = vmatpush1.msra.mxu0 0.0
        %239 = vmatprep.subr.mxu0 0.0
        %240 = vmatpush1.msra.mxu0 0.0
        %241 = vmatprep.subr.mxu0 0.0
        %242 = vmatpush1.msra.mxu0 0.0
        %243 = vmatprep.subr.mxu0 0.0
        %244 = vmatpush1.msra.mxu0 0.0
        %245 = vmatprep.subr.mxu0 0.0
        %246 = vmatpush1.msra.mxu0 0.0
        %247 = vmatprep.subr.mxu0 0.0
        %248 = vmatpush1.msra.mxu0 0.0
        %249 = vmatprep.subr.mxu0 0.0
        %250 = vmatpush1.msra.mxu0 0.0
        %251 = vmatprep.subr.mxu0 0.0
        %252 = vmatpush1.msra.mxu0 0.0
        %253 = vmatprep.subr.mxu0 0.0
        %254 = vmatpush1.msra.mxu0 0.0
        %255 = vmatprep.subr.mxu0 0.0
        %256 = vmatpush1.msra.mxu0 0.0
        %257 = vmatprep.subr.mxu0 0.0
        %258 = vmatpush1.msra.mxu0 0.0
        %259 = vmatprep.subr.mxu0 0.0
        %260 = vmatpush1.msra.mxu0 0.0
        %261 = vmatprep.subr.mxu0 0.0
        %262 = vmatpush1.msra.mxu0 0.0
        %263 = vmatprep.subr.mxu0 0.0
        %264 = vmatpush1.msra.mxu0 0.0
        %265 = vmatprep.subr.mxu0 0.0
        %266 = vmatpush1.msra.mxu0 0.0
        %267 = vmatprep.subr.mxu0 0.0
        %268 = vmatpush1.msra.mxu0 0.0
        %269 = vmatprep.subr.mxu0 0.0
        %270 = vmatpush1.msra.mxu0 0.0
        %271 = vmatprep.subr.mxu0 0.0
        %272 = vmatpush1.msra.mxu0 0.0
        %273 = vmatprep.subr.mxu0 0.0
        %274 = vmatpush1.msra.mxu0 0.0
        %275 = vmatprep.subr.mxu0 0.0
        %276 = vmatpush1.msra.mxu0 0.0
        %277 = vmatprep.subr.mxu0 0.0
        %278 = vmatpush1.msra.mxu0 0.0
        %279 = vmatprep.subr.mxu0 0.0
        %280 = vmatpush1.msra.mxu0 0.0
        %281 = vmatprep.mubr.f32.mxu0 0.0
        %282 = vmatmul.mubr.f32.gmra.mrb[0].mxu0 %v215
        %v283 = vpop.f32.mrb[0].mxu0
        %v284 = vadd.f32 %v211, %v283
        %v285 = vpop.f32.mrb[0].mxu0
        %286 = vdwg.mxu0
        %287 = vst.msk [vmem:[%s200] sm:$0xff] %vm213, %v284
        %s288 = sand.u32 %s97, 1
        %s289 = scalar_lea.sflag [#allocation4], %s288
        %s290 = sand.u32 %s97, 1
        %s291 = smul.addr %s290, 8
        %s292 = scalar_lea.vmem [#allocation7], %s291
        // Predicated region
        $region41: #{_linear.1} parent=31 // pred_check
          %p293 = pneg %p107
        $region42: #{_linear.1} parent=31 // pred_check_branch
          %295 = sbr.rel (%p293) target = $region44
        $region43: #{_linear.1} parent=31 // pred_region
          %s297 = ssub.s32 128, 128
          %298 = vsyncadd %s289, %s297
          %s299 = smul.addr %s21, 128
          %s300 = scalar_lea.hbm %s3, %s299
          %s302 = sshll.u32 %s292, 4
          %s303 = int_to_ptr.vmem [resolvable:$true] %s302
          %305 = dma.vmem_to_hbm [thread:$0]  %s303, 128, %s300, %s289
        $region44: #{_linear.1} parent=31 // pred_fallthru
          _
      $region32: #{_linear.1} parent=5 // pred_fallthru
        _
      %p306 = scmp.le.s32.totalorder 2, %s16
      // Predicated region
      $region45: #{_linear.1} parent=5 // pred_check
        %p307 = pneg %p306
      $region46: #{_linear.1} parent=5 // pred_check_branch
        %309 = sbr.rel (%p307) target = $region48
      $region47: #{_linear.1} parent=5 // pred_region
        %s310 = ssub.s32 %s16, 2
        // Predicated region
        $region49: #{_linear.1} parent=47 // pred_check
          %p311 = pneg %p113
        $region50: #{_linear.1} parent=47 // pred_check_branch
          %313 = sbr.rel (%p311) target = $region52
        $region51: #{_linear.1} parent=47 // pred_region
          %s314 = sand.u32 %s98, 1
          %s315 = scalar_lea.sflag [#allocation4], %s314
          %s316 = sand.u32 %s98, 1
          %s317 = smul.addr %s316, 8
          %s318 = scalar_lea.vmem [#allocation7], %s317
          %319 = dma.done %s315, 128
        $region52: #{_linear.1} parent=47 // pred_fallthru
          _
      $region48: #{_linear.1} parent=5 // pred_fallthru
        _
    $region6: #{_linear.1} parent=1 // loop_footer
      %s20 = sadd.s32 1, %s16
    $region7: #{_linear.1} parent=1 // loop_footer_branch
      %15 = sbr.rel target = $region3
    $region8: #{_linear.1} parent=1 // loop_exit
      _
    %320 = vsyncpa [#allocation3], 1
    %s321 = scalar_lea.sflag [#allocation3], 1
    %322 = vsyncpa %s321, 1
    %323 = vsyncpa [#allocation6], 1
    %324 = vsyncpa [#allocation4], 1
    %s325 = scalar_lea.sflag [#allocation4], 1
    %326 = vsyncpa %s325, 1

</llo_original>
